<compile_context>
chip_gen: v7x
topology: tpu7x:2x2x1
jax: 0.10.0
libtpu: 0.0.40
codegen_flags: <defaults>
</compile_context>

<pallas_src>
import functools

import jax
import jax.numpy as jnp
from jax import lax
from jax.experimental import pallas as pl
from jax.experimental.pallas import tpu as pltpu


# ----------------------------- kernel ---------------------------------------

def _nms_mask_kernel(s_ref, m_ref, scr_ref, *, pad, thr):
    # s_ref  : (1, c_blk, H, W)   raw scores block (input dtype)
    # m_ref  : (1, c_blk, H, W)   int8 0/1 maxima mask
    # scr_ref: (Hs, Wp) VMEM scratch; Hs >= H + 2*pad, Wp >= W + pad (Wp % 128 == 0)
    _, c_blk, H, W = s_ref.shape
    Hs, Wp = scr_ref.shape

    # -inf halo: fill the scratch once; the per-channel store below only touches
    # rows [pad, pad+H) x cols [0, W), so the halo survives across channels.
    scr_ref[...] = jnp.full((Hs, Wp), -jnp.inf, dtype=s_ref.dtype)

    for c in range(c_blk):                       # small, wrapper-capped unroll
        s = s_ref[0, c]                          # (H, W)
        scr_ref[pad:pad + H, 0:W] = s            # place plane inside the halo

        # ---- H (sublane) pass: shifted ref loads (address arithmetic only) ----
        vmax = scr_ref[0:H, :]                   # window row i - pad
        for t in range(1, 2 * pad + 1):
            vmax = jnp.maximum(vmax, scr_ref[t:t + H, :])

        # ---- W (lane) pass: symmetric rolls; wrap lands on -inf columns -------
        # (for nms_size=5 a log-step / van-Herk scheme needs the same number of
        #  rolls, so the simple symmetric form is kept)
        pooled = vmax
        for d in range(1, pad + 1):
            pooled = jnp.maximum(pooled, pltpu.roll(vmax, d, 1))
            pooled = jnp.maximum(pooled, pltpu.roll(vmax, Wp - d, 1))

        maxima = jnp.logical_and(s == pooled[:, 0:W], s > thr)
        m_ref[0, c] = maxima.astype(jnp.int8)


# ----------------------------- wrappers --------------------------------------

def non_max_suppression_mask(scores, thr=0.0, nms_size=5):
    """int8 0/1 maxima mask of NonMaxSuppression (everything before nonzero())."""
    assert nms_size % 2 == 1, "nms_size must be odd"
    if not jnp.issubdtype(scores.dtype, jnp.floating):
        scores = scores.astype(jnp.float32)      # MaxPool2d semantics need floats
    B, C, H, W = scores.shape
    pad = nms_size // 2

    # scratch plane holding the -inf halo; lane-aligned width
    Hs = -(-(H + 2 * pad) // 8) * 8
    Wp = -(-(W + pad) // 128) * 128

    # Fold several channel planes into one grid step for small images (amortizes
    # per-step overhead) while keeping per-step VMEM small on every generation.
    itemsize = jnp.dtype(scores.dtype).itemsize
    plane_bytes = H * W * itemsize
    cb_cap = int(max(1, min(C, (1 << 20) // max(plane_bytes, 1), 8)))
    c_blk = 1
    for d in range(cb_cap, 0, -1):
        if C % d == 0:
            c_blk = d
            break
    # TODO(synk): very large single planes (>~2 MiB) would additionally need an
    # H-tiled grid axis with a 2*pad halo to stay inside v7x's smaller VMEM.

    grid = (B, C // c_blk)
    return pl.pallas_call(
        functools.partial(_nms_mask_kernel, pad=pad, thr=float(thr)),
        out_shape=jax.ShapeDtypeStruct((B, C, H, W), jnp.int8),
        grid=grid,
        in_specs=[pl.BlockSpec((1, c_blk, H, W), lambda b, c: (b, c, 0, 0))],
        out_specs=pl.BlockSpec((1, c_blk, H, W), lambda b, c: (b, c, 0, 0)),
        scratch_shapes=[pltpu.VMEM((Hs, Wp), scores.dtype)],
        compiler_params=pltpu.CompilerParams(
            dimension_semantics=("parallel", "parallel")),
    )(scores)


def non_max_suppression(scores, thr=0.0, nms_size=5, max_keypoints=None):
    """JAX/Pallas equivalent of NonMaxSuppression.forward.

    Returns (coords, count): coords is int32 (2, max_keypoints) with the
    (row, col) of kept maxima (rows 2:4 of `maxima.nonzero().t()`), padded with
    -1; count is the true number of keypoints.
    """
    # TODO(synk): torch's `maxima.nonzero().t()[2:4]` has a data-dependent output
    # length; under static TPU shapes we return a fixed-capacity, -1-padded list.
    B, C, H, W = scores.shape
    if max_keypoints is None:
        # capped default - a full-size nonzero() epilogue would dwarf the kernel
        max_keypoints = min(B * C * H * W, 4096)
    mask = non_max_suppression_mask(scores, thr=thr, nms_size=nms_size)  # int8
    nz = jnp.nonzero(mask, size=max_keypoints, fill_value=-1)
    coords = jnp.stack([nz[2], nz[3]], axis=0).astype(jnp.int32)
    count = jnp.sum(mask.astype(jnp.int32))
    return coords, count


# ----------------------------- main ------------------------------------------

if __name__ == "__main__":
    key = jax.random.PRNGKey(0)
    B, C, H, W = 2, 4, 16, 16
    scores = jax.random.uniform(key, (B, C, H, W), dtype=jnp.float32)

    mask = jax.jit(non_max_suppression_mask)(scores)
    coords, count = jax.jit(
        functools.partial(non_max_suppression, max_keypoints=H * W))(scores)
    jax.block_until_ready((mask, coords, count))

    assert mask.shape == (B, C, H, W) and mask.dtype == jnp.int8
    assert coords.shape == (2, H * W) and coords.dtype == jnp.int32

    # reference check: pure-JAX max pool with PyTorch MaxPool2d(5,1,2) semantics
    ref_pool = lax.reduce_window(scores, -jnp.inf, lax.max,
                                 (1, 1, 5, 5), (1, 1, 1, 1), "SAME")
    ref_mask = jnp.logical_and(scores == ref_pool, scores > 0.0)
    assert bool(jnp.all((mask != 0) == ref_mask)), "mask mismatch vs reference"
    assert int(count) == int(ref_mask.sum())

    print("KERNEL_OK")
</pallas_src>

<mosaic_0001>
module attributes {stable_mosaic.version = 11 : i64} {
  func.func @_nms_mask_kernel(%arg0: i32, %arg1: i32, %arg2: memref<1x4x16x16xf32, #tpu.memory_space<vmem>>, %arg3: memref<1x4x16x16xi8, #tpu.memory_space<vmem>>, %arg4: memref<24x128xf32, #tpu.memory_space<vmem>>) attributes {dimension_semantics = [#tpu.dimension_semantics<parallel>, #tpu.dimension_semantics<parallel>], iteration_bounds = array<i64: 2, 1>, scalar_prefetch = 0 : i64, scratch_operands = 1 : i64, tpu.core_type = #tpu.core_type<tc>, window_params = [{transform_indices = @transform_0, window_bounds = array<i64: 1, 4, 16, 16>}, {transform_indices = @transform_1, window_bounds = array<i64: 1, 4, 16, 16>}]} {
    %cst = arith.constant 0xFF800000 : f32
    %0 = vector.broadcast %cst : f32 to vector<24x128xf32>
    %c0 = arith.constant 0 : index
    %c0_0 = arith.constant 0 : index
    %1 = vector.load %arg4[%c0, %c0_0] : memref<24x128xf32, #tpu.memory_space<vmem>>, vector<24x128xf32>
    tpu.vector_store %arg4[%c0, %c0_0], %0 {strides = array<i32>} : memref<24x128xf32, #tpu.memory_space<vmem>>, vector<24x128xf32>,
    %c0_1 = arith.constant 0 : index
    %c0_2 = arith.constant 0 : index
    %c0_3 = arith.constant 0 : index
    %c0_4 = arith.constant 0 : index
    %2 = vector.load %arg2[%c0_1, %c0_2, %c0_3, %c0_4] : memref<1x4x16x16xf32, #tpu.memory_space<vmem>>, vector<1x1x16x16xf32>
    %3 = vector.shape_cast %2 : vector<1x1x16x16xf32> to vector<16x16xf32>
    %c2 = arith.constant 2 : index
    %c0_5 = arith.constant 0 : index
    %4 = vector.load %arg4[%c2, %c0_5] : memref<24x128xf32, #tpu.memory_space<vmem>>, vector<16x16xf32>
    tpu.vector_store %arg4[%c2, %c0_5], %3 {strides = array<i32>} : memref<24x128xf32, #tpu.memory_space<vmem>>, vector<16x16xf32>,
    %c0_6 = arith.constant 0 : index
    %c0_7 = arith.constant 0 : index
    %5 = vector.load %arg4[%c0_6, %c0_7] : memref<24x128xf32, #tpu.memory_space<vmem>>, vector<16x128xf32>
    %c1 = arith.constant 1 : index
    %c0_8 = arith.constant 0 : index
    %6 = vector.load %arg4[%c1, %c0_8] : memref<24x128xf32, #tpu.memory_space<vmem>>, vector<16x128xf32>
    %7 = arith.maximumf %5, %6 : vector<16x128xf32>
    %c2_9 = arith.constant 2 : index
    %c0_10 = arith.constant 0 : index
    %8 = vector.load %arg4[%c2_9, %c0_10] : memref<24x128xf32, #tpu.memory_space<vmem>>, vector<16x128xf32>
    %9 = arith.maximumf %7, %8 : vector<16x128xf32>
    %c3 = arith.constant 3 : index
    %c0_11 = arith.constant 0 : index
    %10 = vector.load %arg4[%c3, %c0_11] : memref<24x128xf32, #tpu.memory_space<vmem>>, vector<16x128xf32>
    %11 = arith.maximumf %9, %10 : vector<16x128xf32>
    %c4 = arith.constant 4 : index
    %c0_12 = arith.constant 0 : index
    %12 = vector.load %arg4[%c4, %c0_12] : memref<24x128xf32, #tpu.memory_space<vmem>>, vector<16x128xf32>
    %13 = arith.maximumf %11, %12 : vector<16x128xf32>
    %c1_i32 = arith.constant 1 : i32
    %14 = tpu.dynamic_rotate %13 by %c1_i32 dim 1 : vector<16x128xf32>, i32 -> vector<16x128xf32>
    %15 = arith.maximumf %13, %14 : vector<16x128xf32>
    %c127_i32 = arith.constant 127 : i32
    %16 = tpu.dynamic_rotate %13 by %c127_i32 dim 1 : vector<16x128xf32>, i32 -> vector<16x128xf32>
    %17 = arith.maximumf %15, %16 : vector<16x128xf32>
    %c2_i32 = arith.constant 2 : i32
    %18 = tpu.dynamic_rotate %13 by %c2_i32 dim 1 : vector<16x128xf32>, i32 -> vector<16x128xf32>
    %19 = arith.maximumf %17, %18 : vector<16x128xf32>
    %c126_i32 = arith.constant 126 : i32
    %20 = tpu.dynamic_rotate %13 by %c126_i32 dim 1 : vector<16x128xf32>, i32 -> vector<16x128xf32>
    %21 = arith.maximumf %19, %20 : vector<16x128xf32>
    %22 = vector.extract_strided_slice %21 {offsets = [0, 0], sizes = [16, 16], strides = [1, 1]} : vector<16x128xf32> to vector<16x16xf32>
    %23 = arith.cmpf oeq, %3, %22 : vector<16x16xf32>
    %cst_13 = arith.constant 0.000000e+00 : f32
    %24 = vector.broadcast %cst_13 : f32 to vector<16x16xf32>
    %25 = arith.cmpf ogt, %3, %24 : vector<16x16xf32>
    %26 = arith.andi %23, %25 : vector<16x16xi1>
    %27 = arith.extui %26 : vector<16x16xi1> to vector<16x16xi8>
    %c0_14 = arith.constant 0 : index
    %c0_15 = arith.constant 0 : index
    %c0_16 = arith.constant 0 : index
    %c0_17 = arith.constant 0 : index
    %28 = vector.load %arg3[%c0_14, %c0_15, %c0_16, %c0_17] : memref<1x4x16x16xi8, #tpu.memory_space<vmem>>, vector<1x1x16x16xi8>
    %29 = vector.shape_cast %28 : vector<1x1x16x16xi8> to vector<16x16xi8>
    %30 = vector.shape_cast %27 : vector<16x16xi8> to vector<1x1x16x16xi8>
    tpu.vector_store %arg3[%c0_14, %c0_15, %c0_16, %c0_17], %30 {strides = array<i32>} : memref<1x4x16x16xi8, #tpu.memory_space<vmem>>, vector<1x1x16x16xi8>,
    %c0_18 = arith.constant 0 : index
    %c1_19 = arith.constant 1 : index
    %c0_20 = arith.constant 0 : index
    %c0_21 = arith.constant 0 : index
    %31 = vector.load %arg2[%c0_18, %c1_19, %c0_20, %c0_21] : memref<1x4x16x16xf32, #tpu.memory_space<vmem>>, vector<1x1x16x16xf32>
    %32 = vector.shape_cast %31 : vector<1x1x16x16xf32> to vector<16x16xf32>
    %c2_22 = arith.constant 2 : index
    %c0_23 = arith.constant 0 : index
    %33 = vector.load %arg4[%c2_22, %c0_23] : memref<24x128xf32, #tpu.memory_space<vmem>>, vector<16x16xf32>
    tpu.vector_store %arg4[%c2_22, %c0_23], %32 {strides = array<i32>} : memref<24x128xf32, #tpu.memory_space<vmem>>, vector<16x16xf32>,
    %c0_24 = arith.constant 0 : index
    %c0_25 = arith.constant 0 : index
    %34 = vector.load %arg4[%c0_24, %c0_25] : memref<24x128xf32, #tpu.memory_space<vmem>>, vector<16x128xf32>
    %c1_26 = arith.constant 1 : index
    %c0_27 = arith.constant 0 : index
    %35 = vector.load %arg4[%c1_26, %c0_27] : memref<24x128xf32, #tpu.memory_space<vmem>>, vector<16x128xf32>
    %36 = arith.maximumf %34, %35 : vector<16x128xf32>
    %c2_28 = arith.constant 2 : index
    %c0_29 = arith.constant 0 : index
    %37 = vector.load %arg4[%c2_28, %c0_29] : memref<24x128xf32, #tpu.memory_space<vmem>>, vector<16x128xf32>
    %38 = arith.maximumf %36, %37 : vector<16x128xf32>
    %c3_30 = arith.constant 3 : index
    %c0_31 = arith.constant 0 : index
    %39 = vector.load %arg4[%c3_30, %c0_31] : memref<24x128xf32, #tpu.memory_space<vmem>>, vector<16x128xf32>
    %40 = arith.maximumf %38, %39 : vector<16x128xf32>
    %c4_32 = arith.constant 4 : index
    %c0_33 = arith.constant 0 : index
    %41 = vector.load %arg4[%c4_32, %c0_33] : memref<24x128xf32, #tpu.memory_space<vmem>>, vector<16x128xf32>
    %42 = arith.maximumf %40, %41 : vector<16x128xf32>
    %c1_i32_34 = arith.constant 1 : i32
    %43 = tpu.dynamic_rotate %42 by %c1_i32_34 dim 1 : vector<16x128xf32>, i32 -> vector<16x128xf32>
    %44 = arith.maximumf %42, %43 : vector<16x128xf32>
    %c127_i32_35 = arith.constant 127 : i32
    %45 = tpu.dynamic_rotate %42 by %c127_i32_35 dim 1 : vector<16x128xf32>, i32 -> vector<16x128xf32>
    %46 = arith.maximumf %44, %45 : vector<16x128xf32>
    %c2_i32_36 = arith.constant 2 : i32
    %47 = tpu.dynamic_rotate %42 by %c2_i32_36 dim 1 : vector<16x128xf32>, i32 -> vector<16x128xf32>
    %48 = arith.maximumf %46, %47 : vector<16x128xf32>
    %c126_i32_37 = arith.constant 126 : i32
    %49 = tpu.dynamic_rotate %42 by %c126_i32_37 dim 1 : vector<16x128xf32>, i32 -> vector<16x128xf32>
    %50 = arith.maximumf %48, %49 : vector<16x128xf32>
    %51 = vector.extract_strided_slice %50 {offsets = [0, 0], sizes = [16, 16], strides = [1, 1]} : vector<16x128xf32> to vector<16x16xf32>
    %52 = arith.cmpf oeq, %32, %51 : vector<16x16xf32>
    %cst_38 = arith.constant 0.000000e+00 : f32
    %53 = vector.broadcast %cst_38 : f32 to vector<16x16xf32>
    %54 = arith.cmpf ogt, %32, %53 : vector<16x16xf32>
    %55 = arith.andi %52, %54 : vector<16x16xi1>
    %56 = arith.extui %55 : vector<16x16xi1> to vector<16x16xi8>
    %c0_39 = arith.constant 0 : index
    %c1_40 = arith.constant 1 : index
    %c0_41 = arith.constant 0 : index
    %c0_42 = arith.constant 0 : index
    %57 = vector.load %arg3[%c0_39, %c1_40, %c0_41, %c0_42] : memref<1x4x16x16xi8, #tpu.memory_space<vmem>>, vector<1x1x16x16xi8>
    %58 = vector.shape_cast %57 : vector<1x1x16x16xi8> to vector<16x16xi8>
    %59 = vector.shape_cast %56 : vector<16x16xi8> to vector<1x1x16x16xi8>
    tpu.vector_store %arg3[%c0_39, %c1_40, %c0_41, %c0_42], %59 {strides = array<i32>} : memref<1x4x16x16xi8, #tpu.memory_space<vmem>>, vector<1x1x16x16xi8>,
    %c0_43 = arith.constant 0 : index
    %c2_44 = arith.constant 2 : index
    %c0_45 = arith.constant 0 : index
    %c0_46 = arith.constant 0 : index
    %60 = vector.load %arg2[%c0_43, %c2_44, %c0_45, %c0_46] : memref<1x4x16x16xf32, #tpu.memory_space<vmem>>, vector<1x1x16x16xf32>
    %61 = vector.shape_cast %60 : vector<1x1x16x16xf32> to vector<16x16xf32>
    %c2_47 = arith.constant 2 : index
    %c0_48 = arith.constant 0 : index
    %62 = vector.load %arg4[%c2_47, %c0_48] : memref<24x128xf32, #tpu.memory_space<vmem>>, vector<16x16xf32>
    tpu.vector_store %arg4[%c2_47, %c0_48], %61 {strides = array<i32>} : memref<24x128xf32, #tpu.memory_space<vmem>>, vector<16x16xf32>,
    %c0_49 = arith.constant 0 : index
    %c0_50 = arith.constant 0 : index
    %63 = vector.load %arg4[%c0_49, %c0_50] : memref<24x128xf32, #tpu.memory_space<vmem>>, vector<16x128xf32>
    %c1_51 = arith.constant 1 : index
    %c0_52 = arith.constant 0 : index
    %64 = vector.load %arg4[%c1_51, %c0_52] : memref<24x128xf32, #tpu.memory_space<vmem>>, vector<16x128xf32>
    %65 = arith.maximumf %63, %64 : vector<16x128xf32>
    %c2_53 = arith.constant 2 : index
    %c0_54 = arith.constant 0 : index
    %66 = vector.load %arg4[%c2_53, %c0_54] : memref<24x128xf32, #tpu.memory_space<vmem>>, vector<16x128xf32>
    %67 = arith.maximumf %65, %66 : vector<16x128xf32>
    %c3_55 = arith.constant 3 : index
    %c0_56 = arith.constant 0 : index
    %68 = vector.load %arg4[%c3_55, %c0_56] : memref<24x128xf32, #tpu.memory_space<vmem>>, vector<16x128xf32>
    %69 = arith.maximumf %67, %68 : vector<16x128xf32>
    %c4_57 = arith.constant 4 : index
    %c0_58 = arith.constant 0 : index
    %70 = vector.load %arg4[%c4_57, %c0_58] : memref<24x128xf32, #tpu.memory_space<vmem>>, vector<16x128xf32>
    %71 = arith.maximumf %69, %70 : vector<16x128xf32>
    %c1_i32_59 = arith.constant 1 : i32
    %72 = tpu.dynamic_rotate %71 by %c1_i32_59 dim 1 : vector<16x128xf32>, i32 -> vector<16x128xf32>
    %73 = arith.maximumf %71, %72 : vector<16x128xf32>
    %c127_i32_60 = arith.constant 127 : i32
    %74 = tpu.dynamic_rotate %71 by %c127_i32_60 dim 1 : vector<16x128xf32>, i32 -> vector<16x128xf32>
    %75 = arith.maximumf %73, %74 : vector<16x128xf32>
    %c2_i32_61 = arith.constant 2 : i32
    %76 = tpu.dynamic_rotate %71 by %c2_i32_61 dim 1 : vector<16x128xf32>, i32 -> vector<16x128xf32>
    %77 = arith.maximumf %75, %76 : vector<16x128xf32>
    %c126_i32_62 = arith.constant 126 : i32
    %78 = tpu.dynamic_rotate %71 by %c126_i32_62 dim 1 : vector<16x128xf32>, i32 -> vector<16x128xf32>
    %79 = arith.maximumf %77, %78 : vector<16x128xf32>
    %80 = vector.extract_strided_slice %79 {offsets = [0, 0], sizes = [16, 16], strides = [1, 1]} : vector<16x128xf32> to vector<16x16xf32>
    %81 = arith.cmpf oeq, %61, %80 : vector<16x16xf32>
    %cst_63 = arith.constant 0.000000e+00 : f32
    %82 = vector.broadcast %cst_63 : f32 to vector<16x16xf32>
    %83 = arith.cmpf ogt, %61, %82 : vector<16x16xf32>
    %84 = arith.andi %81, %83 : vector<16x16xi1>
    %85 = arith.extui %84 : vector<16x16xi1> to vector<16x16xi8>
    %c0_64 = arith.constant 0 : index
    %c2_65 = arith.constant 2 : index
    %c0_66 = arith.constant 0 : index
    %c0_67 = arith.constant 0 : index
    %86 = vector.load %arg3[%c0_64, %c2_65, %c0_66, %c0_67] : memref<1x4x16x16xi8, #tpu.memory_space<vmem>>, vector<1x1x16x16xi8>
    %87 = vector.shape_cast %86 : vector<1x1x16x16xi8> to vector<16x16xi8>
    %88 = vector.shape_cast %85 : vector<16x16xi8> to vector<1x1x16x16xi8>
    tpu.vector_store %arg3[%c0_64, %c2_65, %c0_66, %c0_67], %88 {strides = array<i32>} : memref<1x4x16x16xi8, #tpu.memory_space<vmem>>, vector<1x1x16x16xi8>,
    %c0_68 = arith.constant 0 : index
    %c3_69 = arith.constant 3 : index
    %c0_70 = arith.constant 0 : index
    %c0_71 = arith.constant 0 : index
    %89 = vector.load %arg2[%c0_68, %c3_69, %c0_70, %c0_71] : memref<1x4x16x16xf32, #tpu.memory_space<vmem>>, vector<1x1x16x16xf32>
    %90 = vector.shape_cast %89 : vector<1x1x16x16xf32> to vector<16x16xf32>
    %c2_72 = arith.constant 2 : index
    %c0_73 = arith.constant 0 : index
    %91 = vector.load %arg4[%c2_72, %c0_73] : memref<24x128xf32, #tpu.memory_space<vmem>>, vector<16x16xf32>
    tpu.vector_store %arg4[%c2_72, %c0_73], %90 {strides = array<i32>} : memref<24x128xf32, #tpu.memory_space<vmem>>, vector<16x16xf32>,
    %c0_74 = arith.constant 0 : index
    %c0_75 = arith.constant 0 : index
    %92 = vector.load %arg4[%c0_74, %c0_75] : memref<24x128xf32, #tpu.memory_space<vmem>>, vector<16x128xf32>
    %c1_76 = arith.constant 1 : index
    %c0_77 = arith.constant 0 : index
    %93 = vector.load %arg4[%c1_76, %c0_77] : memref<24x128xf32, #tpu.memory_space<vmem>>, vector<16x128xf32>
    %94 = arith.maximumf %92, %93 : vector<16x128xf32>
    %c2_78 = arith.constant 2 : index
    %c0_79 = arith.constant 0 : index
    %95 = vector.load %arg4[%c2_78, %c0_79] : memref<24x128xf32, #tpu.memory_space<vmem>>, vector<16x128xf32>
    %96 = arith.maximumf %94, %95 : vector<16x128xf32>
    %c3_80 = arith.constant 3 : index
    %c0_81 = arith.constant 0 : index
    %97 = vector.load %arg4[%c3_80, %c0_81] : memref<24x128xf32, #tpu.memory_space<vmem>>, vector<16x128xf32>
    %98 = arith.maximumf %96, %97 : vector<16x128xf32>
    %c4_82 = arith.constant 4 : index
    %c0_83 = arith.constant 0 : index
    %99 = vector.load %arg4[%c4_82, %c0_83] : memref<24x128xf32, #tpu.memory_space<vmem>>, vector<16x128xf32>
    %100 = arith.maximumf %98, %99 : vector<16x128xf32>
    %c1_i32_84 = arith.constant 1 : i32
    %101 = tpu.dynamic_rotate %100 by %c1_i32_84 dim 1 : vector<16x128xf32>, i32 -> vector<16x128xf32>
    %102 = arith.maximumf %100, %101 : vector<16x128xf32>
    %c127_i32_85 = arith.constant 127 : i32
    %103 = tpu.dynamic_rotate %100 by %c127_i32_85 dim 1 : vector<16x128xf32>, i32 -> vector<16x128xf32>
    %104 = arith.maximumf %102, %103 : vector<16x128xf32>
    %c2_i32_86 = arith.constant 2 : i32
    %105 = tpu.dynamic_rotate %100 by %c2_i32_86 dim 1 : vector<16x128xf32>, i32 -> vector<16x128xf32>
    %106 = arith.maximumf %104, %105 : vector<16x128xf32>
    %c126_i32_87 = arith.constant 126 : i32
    %107 = tpu.dynamic_rotate %100 by %c126_i32_87 dim 1 : vector<16x128xf32>, i32 -> vector<16x128xf32>
    %108 = arith.maximumf %106, %107 : vector<16x128xf32>
    %109 = vector.extract_strided_slice %108 {offsets = [0, 0], sizes = [16, 16], strides = [1, 1]} : vector<16x128xf32> to vector<16x16xf32>
    %110 = arith.cmpf oeq, %90, %109 : vector<16x16xf32>
    %cst_88 = arith.constant 0.000000e+00 : f32
    %111 = vector.broadcast %cst_88 : f32 to vector<16x16xf32>
    %112 = arith.cmpf ogt, %90, %111 : vector<16x16xf32>
    %113 = arith.andi %110, %112 : vector<16x16xi1>
    %114 = arith.extui %113 : vector<16x16xi1> to vector<16x16xi8>
    %c0_89 = arith.constant 0 : index
    %c3_90 = arith.constant 3 : index
    %c0_91 = arith.constant 0 : index
    %c0_92 = arith.constant 0 : index
    %115 = vector.load %arg3[%c0_89, %c3_90, %c0_91, %c0_92] : memref<1x4x16x16xi8, #tpu.memory_space<vmem>>, vector<1x1x16x16xi8>
    %116 = vector.shape_cast %115 : vector<1x1x16x16xi8> to vector<16x16xi8>
    %117 = vector.shape_cast %114 : vector<16x16xi8> to vector<1x1x16x16xi8>
    tpu.vector_store %arg3[%c0_89, %c3_90, %c0_91, %c0_92], %117 {strides = array<i32>} : memref<1x4x16x16xi8, #tpu.memory_space<vmem>>, vector<1x1x16x16xi8>,
    return
  }
  func.func @transform_0(%arg0: i32, %arg1: i32) -> (i32, i32, i32, i32) {
    %c0_i32 = arith.constant 0 : i32
    %c0_i32_0 = arith.constant 0 : i32
    %c0_i32_1 = arith.constant 0 : i32
    return %arg0, %arg1, %c0_i32, %c0_i32_0 : i32, i32, i32, i32
  }
  func.func @transform_1(%arg0: i32, %arg1: i32) -> (i32, i32, i32, i32) {
    %c0_i32 = arith.constant 0 : i32
    %c0_i32_0 = arith.constant 0 : i32
    %c0_i32_1 = arith.constant 0 : i32
    return %arg0, %arg1, %c0_i32, %c0_i32_0 : i32, i32, i32, i32
  }
}

</mosaic_0001>

<llo_original>
// kernel: non_max_suppression_mask.1
$region0: #{non_max_suppression_mask.1}
  #allocation0 [shape = 'u32[]', space=smem, size = 0x4, offset = 0x4, fixed_abs, tag = 'smem constant byte address 0x4 - core index']
  #allocation1 [shape = 'u32[144,128]{1,0:T(1,128)}', space=vmem, size = 0x12000, scoped, tag = 'internal scratch']
  #allocation2 [shape = 'f32[24,128]{1,0:T(8,128)}', space=vmem, size = 0x3000, scoped, tag = 'scratch operand']
  %s0 = inlined_call_operand.hbm [shape: f32[2,4,16,16], index: 0, kind: input, shape index: {}]
  %s1 = inlined_call_operand.hbm [shape: s8[2,4,16,16], index: 1, kind: output, shape index: {}]
  %s2 = sld [smem:[#allocation0]]
  $region41: #{non_max_suppression_mask.1} parent=0
    _
  %s4 = ssub.s32 1, %s2
  %s5 = scalar_select 0, %s4, %s2
  $region1: #{non_max_suppression_mask.1} parent=0
    #allocation3 [shape = 'u8[65536]{0}', space=vmem, size = 0x10000, scoped, tag = 'input window, operand 0']
    #allocation4 [shape = 's32[2]{0}', space=sflag, size = 0x8, scoped, tag = 'scoped memory for non_max_suppression_mask.1']
    #allocation5 [shape = 's32[2]{0}', space=sflag, size = 0x8, scoped, tag = 'scoped memory for non_max_suppression_mask.1']
    #allocation6 [shape = 'u8[16384]{0}', space=vmem, size = 0x4000, scoped, tag = 'output window, operand 0']
    %6 = vsyncpa [#allocation4], 0
    %s7 = scalar_lea.sflag [#allocation4], 1
    %8 = vsyncpa %s7, 0
    %9 = vsyncpa [#allocation5], 0
    %s10 = scalar_lea.sflag [#allocation5], 1
    %11 = vsyncpa %s10, 0
    loop: start=0, step=1, limit=4
    $region2: #{non_max_suppression_mask.1} parent=1 // loop_pre_header
      _
    $region3: #{non_max_suppression_mask.1} parent=1 // loop_header
      %s13 = sphi 0, %s17
      %p14 = scmp.ge.s32.totalorder %s13, 4
      %s20 = sphi 0, %s32
      %s21 = sphi 0, %s28
      %s22 = sphi 0, %s20
      %s23 = sphi 0, %s21
      %s24 = sphi 0, %s22
      %s25 = sphi 0, %s23
      %s37 = sphi 0, %s39
      %s40 = sphi 0, %s37
      %s41 = sphi 0, %s40
      %s57 = sphi 0, %s41
      %s65 = sphi 0, %s67
      %s68 = sphi 0, %s65
      %s69 = sphi 0, %s68
      %s85 = sphi 0, %s69
    $region4: #{non_max_suppression_mask.1} parent=1 // loop_header_branch
      %16 = sbr.rel (%p14) target = $region8
    $region5: #{non_max_suppression_mask.1} parent=1 // loop_body
      %s18 = ssub.s32 %s13, 1
      %s19 = ssub.s32 %s13, 2
      %s26 = sadd.s32 1, %s21
      %p27 = scmp.ge.s32.totalorder %s26, 1
      %s28 = scalar_select %p27, 0, %s26
      %s29 = sadd.s32 1, %s20
      %s30 = scalar_select %p27, %s29, %s20
      %p31 = scmp.ge.s32.totalorder %s30, 2
      %s32 = scalar_select %p31, 0, %s30
      %s33 = ssub.s32 %s20, %s32
      %s34 = ssub.s32 %s21, %s28
      %s35 = sor.u32 %s33, %s34
      %p36 = scmp.eq.s32.totalorder %s35, 0
      %s38 = sadd.s32 %s37, 1
      %s39 = scalar_select %p36, %s37, %s38
      %p42 = pneg %p36
      %p43 = scmp.eq.s32.totalorder %s13, 1
      %p44 = por %p42, %p43
      %p45 = scmp.ne.s32.totalorder %s37, %s40
      %p46 = scmp.eq.s32.totalorder %s13, 0
      %p47 = por %p45, %p46
      %p48 = scmp.ne.s32.totalorder %s37, %s40
      %p49 = scmp.eq.s32.totalorder %s18, 1
      %p50 = por %p48, %p49
      %p51 = scmp.ne.s32.totalorder %s40, %s41
      %p52 = scmp.eq.s32.totalorder %s18, 0
      %p53 = por %p51, %p52
      %p54 = scmp.ne.s32.totalorder %s40, %s41
      %p55 = scmp.eq.s32.totalorder %s19, 1
      %p56 = por %p54, %p55
      %p58 = scmp.ne.s32.totalorder %s41, %s57
      %p59 = scmp.eq.s32.totalorder %s19, 0
      %p60 = por %p58, %p59
      %s61 = ssub.s32 %s20, %s32
      %s62 = ssub.s32 %s21, %s28
      %s63 = sor.u32 %s61, %s62
      %p64 = scmp.eq.s32.totalorder %s63, 0
      %s66 = sadd.s32 %s65, 1
      %s67 = scalar_select %p64, %s65, %s66
      %p70 = pneg %p64
      %p71 = scmp.eq.s32.totalorder %s13, 1
      %p72 = por %p70, %p71
      %p73 = scmp.ne.s32.totalorder %s65, %s68
      %p74 = scmp.eq.s32.totalorder %s13, 0
      %p75 = por %p73, %p74
      %p76 = scmp.ne.s32.totalorder %s65, %s68
      %p77 = scmp.eq.s32.totalorder %s18, 1
      %p78 = por %p76, %p77
      %p79 = scmp.ne.s32.totalorder %s68, %s69
      %p80 = scmp.eq.s32.totalorder %s18, 0
      %p81 = por %p79, %p80
      %p82 = scmp.ne.s32.totalorder %s68, %s69
      %p83 = scmp.eq.s32.totalorder %s19, 1
      %p84 = por %p82, %p83
      %p86 = scmp.ne.s32.totalorder %s69, %s85
      %p87 = scmp.eq.s32.totalorder %s19, 0
      %p88 = por %p86, %p87
      %p89 = scmp.le.s32.totalorder 1, %s13
      %p90 = scmp.lt.s32.totalorder %s13, 3
      %p91 = pnand %p89, %p90
      %p92 = pneg %p91
      // Predicated region
      $region9: #{non_max_suppression_mask.1} parent=5 // pred_check
        _
      $region10: #{non_max_suppression_mask.1} parent=5 // pred_check_branch
        %94 = sbr.rel (%p91) target = $region12
      $region11: #{non_max_suppression_mask.1} parent=5 // pred_region
        %s95 = ssub.s32 %s13, 1
      $region12: #{non_max_suppression_mask.1} parent=5 // pred_fallthru
        _
      %p96 = scmp.lt.s32.totalorder %s13, 2
      // Predicated region
      $region13: #{non_max_suppression_mask.1} parent=5 // pred_check
        %p97 = pneg %p96
      $region14: #{non_max_suppression_mask.1} parent=5 // pred_check_branch
        %99 = sbr.rel (%p97) target = $region16
      $region15: #{non_max_suppression_mask.1} parent=5 // pred_region
        // Predicated region
        $region17: #{non_max_suppression_mask.1} parent=15 // pred_check
          %p100 = pneg %p47
        $region18: #{non_max_suppression_mask.1} parent=15 // pred_check_branch
          %102 = sbr.rel (%p100) target = $region20
        $region19: #{non_max_suppression_mask.1} parent=15 // pred_region
          %s103 = sand.u32 %s37, 1
          %s104 = scalar_lea.sflag [#allocation4], %s103
          %s105 = sand.u32 %s37, 1
          %s106 = smul.addr %s105, 64
          %s107 = scalar_lea.vmem [#allocation3], %s106
          %s108 = smul.u32 4, %s21
          %s110 = ssub.s32 1024, 1024
          %111 = vsyncadd %s104, %s110
          %s112 = smul.addr %s108, 2
          %s113 = smul.addr %s20, 8
          %s114 = sadd.s32 %s112, %s113
          %s115 = smul.addr %s114, 128
          %s116 = scalar_lea.hbm %s0, %s115
          %s117 = sshll.u32 %s107, 4
          %s118 = int_to_ptr.vmem [resolvable:$true] %s117
          %123 = dma.hbm_to_vmem [thread:$0]  %s116, 1024, %s118, %s104, 128, 128, 8
        $region20: #{non_max_suppression_mask.1} parent=15 // pred_fallthru
          _
      $region16: #{non_max_suppression_mask.1} parent=5 // pred_fallthru
        _
      %p124 = scmp.le.s32.totalorder 1, %s13
      %p125 = scmp.lt.s32.totalorder %s13, 3
      %p126 = pnand %p124, %p125
      %p127 = pneg %p126
      // Predicated region
      $region21: #{non_max_suppression_mask.1} parent=5 // pred_check
        _
      $region22: #{non_max_suppression_mask.1} parent=5 // pred_check_branch
        %129 = sbr.rel (%p126) target = $region24
      $region23: #{non_max_suppression_mask.1} parent=5 // pred_region
        %s130 = ssub.s32 %s13, 1
        %s131 = sand.u32 %s40, 1
        %s132 = scalar_lea.sflag [#allocation4], %s131
        %s133 = sand.u32 %s40, 1
        %s134 = smul.addr %s133, 64
        %s135 = scalar_lea.vmem [#allocation3], %s134
        // Predicated region
        $region25: #{non_max_suppression_mask.1} parent=23 // pred_check
          %p136 = pneg %p53
        $region26: #{non_max_suppression_mask.1} parent=23 // pred_check_branch
          %138 = sbr.rel (%p136) target = $region28
        $region27: #{non_max_suppression_mask.1} parent=23 // pred_region
          %139 = dma.done %s132, 1024
        $region28: #{non_max_suppression_mask.1} parent=23 // pred_fallthru
          _
        %s140 = sand.u32 %s40, 1
        %s141 = scalar_lea.sflag [#allocation4], %s140
        %s142 = sand.u32 %s40, 1
        %s143 = smul.addr %s142, 64
        %s144 = scalar_lea.vmem [#allocation3], %s143
        %p145 = pneg %p53
        %p146 = pneg %p50
        %p147 = pneg %p81
        %p148 = pneg %p78
        %s149 = sand.u32 %s68, 1
        %s150 = scalar_lea.sflag [#allocation5], %s149
        %s151 = sand.u32 %s68, 1
        %s152 = smul.addr %s151, 16
        %s153 = scalar_lea.vmem [#allocation6], %s152
        %s154 = smul.u32 4, %s23
        %s155 = smul.u32 4, %s23
        %158 = vst [vmem:[#allocation2] sm:$0xff] -inf
        %159 = vst [vmem:[#allocation2 + $0x8] sm:$0xff] -inf
        %160 = vst [vmem:[#allocation2 + $0x10] sm:$0xff] -inf
        %v161 = vld [vmem:[%s135] sm:$0xff]
        %v162 = vld [vmem:[%s135 + $0x8] sm:$0xff]
        %vm163 = vcmask 130048
        %164 = vst.msk [vmem:[#allocation2 + $0x2] sm:$0xff] %vm163, %v161
        %165 = vst.msk [vmem:[#allocation2 + $0xa] sm:$0xff] %vm163, %v162
        %v166 = vld [vmem:[#allocation2] sm:$0xff]
        %v167 = vld [vmem:[#allocation2 + $0x8] sm:$0xff]
        %v168 = vld [vmem:[#allocation2 + $0x1] sm:$0xff]
        %v169 = vld [vmem:[#allocation2 + $0x9] sm:$0xff]
        %v170 = vmax.f32 %v166, %v168
        %v171 = vmax.f32 %v167, %v169
        %v172 = vld [vmem:[#allocation2 + $0x2] sm:$0xff]
        %v173 = vld [vmem:[#allocation2 + $0xa] sm:$0xff]
        %v174 = vmax.f32 %v170, %v172
        %v175 = vmax.f32 %v171, %v173
        %v176 = vld [vmem:[#allocation2 + $0x3] sm:$0xff]
        %v177 = vld [vmem:[#allocation2 + $0xb] sm:$0xff]
        %v178 = vmax.f32 %v174, %v176
        %v179 = vmax.f32 %v175, %v177
        %v180 = vld [vmem:[#allocation2 + $0x4] sm:$0xff]
        %v181 = vld [vmem:[#allocation2 + $0xc] sm:$0xff]
        %v182 = vmax.f32 %v178, %v180
        %v183 = vmax.f32 %v179, %v181
        %184 = vrot.lane.b32.xlu0 %v182, 1
        %v185 = vpop.permute.xlu0 %184
        %186 = vrot.lane.b32.xlu0 %v183, 1
        %v187 = vpop.permute.xlu0 %186
        %v188 = vmax.f32 %v182, %v185
        %v189 = vmax.f32 %v183, %v187
        %190 = vrot.lane.b32.xlu0 %v182, 127
        %v191 = vpop.permute.xlu0 %190
        %192 = vrot.lane.b32.xlu0 %v183, 127
        %v193 = vpop.permute.xlu0 %192
        %v194 = vmax.f32 %v188, %v191
        %v195 = vmax.f32 %v189, %v193
        %196 = vrot.lane.b32.xlu0 %v182, 2
        %v197 = vpop.permute.xlu0 %196
        %198 = vrot.lane.b32.xlu0 %v183, 2
        %v199 = vpop.permute.xlu0 %198
        %v200 = vmax.f32 %v194, %v197
        %v201 = vmax.f32 %v195, %v199
        %202 = vrot.lane.b32.xlu0 %v182, 126
        %v203 = vpop.permute.xlu0 %202
        %204 = vrot.lane.b32.xlu0 %v183, 126
        %v205 = vpop.permute.xlu0 %204
        %v206 = vmax.f32 %v200, %v203
        %v207 = vmax.f32 %v201, %v205
        %vm208 = vcmp.eq.f32.partialorder %v161, %v206
        %vm209 = vcmp.eq.f32.partialorder %v162, %v207
        %vm210 = vcmp.gt.f32.partialorder %v161, 0.0
        %vm211 = vcmp.gt.f32.partialorder %v162, 0.0
        %vm212 = vmand %vm208, %vm210
        %vm213 = vmand %vm209, %vm211
        %vm214 = vmpackc.low %vm213, %vm212
        %vm215 = vmpackc.even %vm214, %vm214
        %v216 = vsel %vm215, 16843009, 0
        %v217 = vunpack.c.0.s8 %v216
        %v218 = vunpack.c.1.s8 %v216
        %v219 = vpack.c.b16 %v217, %v217
        %v220 = vpack.c.b8 %v219, %v219
        %v221 = vpack.c.b16 %v218, %v218
        %v222 = vpack.c.b8 %v221, %v221
        %vm223 = vcmask 123904
        %224 = vst.msk [vmem:[%s153] sm:$0x3] %vm223, %v220
        %225 = vst.msk [vmem:[%s153 + $0x2] sm:$0x3] %vm223, %v222
        %s226 = scalar_lea.vmem %s135, 16 [#allocation3]
        %v227 = vld [vmem:[%s226] sm:$0xff]
        %v228 = vld [vmem:[%s226 + $0x8] sm:$0xff]
        %229 = vst.msk [vmem:[#allocation2 + $0x2] sm:$0xff] %vm163, %v227
        %230 = vst.msk [vmem:[#allocation2 + $0xa] sm:$0xff] %vm163, %v228
        %v231 = vld [vmem:[#allocation2] sm:$0xff]
        %v232 = vld [vmem:[#allocation2 + $0x8] sm:$0xff]
        %v233 = vld [vmem:[#allocation2 + $0x1] sm:$0xff]
        %v234 = vld [vmem:[#allocation2 + $0x9] sm:$0xff]
        %v235 = vmax.f32 %v231, %v233
        %v236 = vmax.f32 %v232, %v234
        %v237 = vld [vmem:[#allocation2 + $0x2] sm:$0xff]
        %v238 = vld [vmem:[#allocation2 + $0xa] sm:$0xff]
        %v239 = vmax.f32 %v235, %v237
        %v240 = vmax.f32 %v236, %v238
        %v241 = vld [vmem:[#allocation2 + $0x3] sm:$0xff]
        %v242 = vld [vmem:[#allocation2 + $0xb] sm:$0xff]
        %v243 = vmax.f32 %v239, %v241
        %v244 = vmax.f32 %v240, %v242
        %v245 = vld [vmem:[#allocation2 + $0x4] sm:$0xff]
        %v246 = vld [vmem:[#allocation2 + $0xc] sm:$0xff]
        %v247 = vmax.f32 %v243, %v245
        %v248 = vmax.f32 %v244, %v246
        %249 = vrot.lane.b32.xlu0 %v247, 1
        %v250 = vpop.permute.xlu0 %249
        %251 = vrot.lane.b32.xlu0 %v248, 1
        %v252 = vpop.permute.xlu0 %251
        %v253 = vmax.f32 %v247, %v250
        %v254 = vmax.f32 %v248, %v252
        %255 = vrot.lane.b32.xlu0 %v247, 127
        %v256 = vpop.permute.xlu0 %255
        %257 = vrot.lane.b32.xlu0 %v248, 127
        %v258 = vpop.permute.xlu0 %257
        %v259 = vmax.f32 %v253, %v256
        %v260 = vmax.f32 %v254, %v258
        %261 = vrot.lane.b32.xlu0 %v247, 2
        %v262 = vpop.permute.xlu0 %261
        %263 = vrot.lane.b32.xlu0 %v248, 2
        %v264 = vpop.permute.xlu0 %263
        %v265 = vmax.f32 %v259, %v262
        %v266 = vmax.f32 %v260, %v264
        %267 = vrot.lane.b32.xlu0 %v247, 126
        %v268 = vpop.permute.xlu0 %267
        %269 = vrot.lane.b32.xlu0 %v248, 126
        %v270 = vpop.permute.xlu0 %269
        %v271 = vmax.f32 %v265, %v268
        %v272 = vmax.f32 %v266, %v270
        %vm273 = vcmp.eq.f32.partialorder %v227, %v271
        %vm274 = vcmp.eq.f32.partialorder %v228, %v272
        %vm275 = vcmp.gt.f32.partialorder %v227, 0.0
        %vm276 = vcmp.gt.f32.partialorder %v228, 0.0
        %vm277 = vmand %vm273, %vm275
        %vm278 = vmand %vm274, %vm276
        %vm279 = vmpackc.low %vm278, %vm277
        %vm280 = vmpackc.even %vm279, %vm279
        %v281 = vsel %vm280, 16843009, 0
        %v282 = vunpack.c.0.s8 %v281
        %v283 = vunpack.c.1.s8 %v281
        %v284 = vpack.c.b16 %v282, %v282
        %v285 = vpack.c.b8 %v284, %v284
        %v286 = vpack.c.b16 %v283, %v283
        %v287 = vpack.c.b8 %v286, %v286
        %s288 = scalar_lea.vmem %s153, 4 [#allocation6]
        %289 = vst.msk [vmem:[%s288] sm:$0x3] %vm223, %v285
        %290 = vst.msk [vmem:[%s288 + $0x2] sm:$0x3] %vm223, %v287
        %s291 = scalar_lea.vmem %s135, 32 [#allocation3]
        %v292 = vld [vmem:[%s291] sm:$0xff]
        %v293 = vld [vmem:[%s291 + $0x8] sm:$0xff]
        %294 = vst.msk [vmem:[#allocation2 + $0x2] sm:$0xff] %vm163, %v292
        %295 = vst.msk [vmem:[#allocation2 + $0xa] sm:$0xff] %vm163, %v293
        %v296 = vld [vmem:[#allocation2] sm:$0xff]
        %v297 = vld [vmem:[#allocation2 + $0x8] sm:$0xff]
        %v298 = vld [vmem:[#allocation2 + $0x1] sm:$0xff]
        %v299 = vld [vmem:[#allocation2 + $0x9] sm:$0xff]
        %v300 = vmax.f32 %v296, %v298
        %v301 = vmax.f32 %v297, %v299
        %v302 = vld [vmem:[#allocation2 + $0x2] sm:$0xff]
        %v303 = vld [vmem:[#allocation2 + $0xa] sm:$0xff]
        %v304 = vmax.f32 %v300, %v302
        %v305 = vmax.f32 %v301, %v303
        %v306 = vld [vmem:[#allocation2 + $0x3] sm:$0xff]
        %v307 = vld [vmem:[#allocation2 + $0xb] sm:$0xff]
        %v308 = vmax.f32 %v304, %v306
        %v309 = vmax.f32 %v305, %v307
        %v310 = vld [vmem:[#allocation2 + $0x4] sm:$0xff]
        %v311 = vld [vmem:[#allocation2 + $0xc] sm:$0xff]
        %v312 = vmax.f32 %v308, %v310
        %v313 = vmax.f32 %v309, %v311
        %314 = vrot.lane.b32.xlu0 %v312, 1
        %v315 = vpop.permute.xlu0 %314
        %316 = vrot.lane.b32.xlu0 %v313, 1
        %v317 = vpop.permute.xlu0 %316
        %v318 = vmax.f32 %v312, %v315
        %v319 = vmax.f32 %v313, %v317
        %320 = vrot.lane.b32.xlu0 %v312, 127
        %v321 = vpop.permute.xlu0 %320
        %322 = vrot.lane.b32.xlu0 %v313, 127
        %v323 = vpop.permute.xlu0 %322
        %v324 = vmax.f32 %v318, %v321
        %v325 = vmax.f32 %v319, %v323
        %326 = vrot.lane.b32.xlu0 %v312, 2
        %v327 = vpop.permute.xlu0 %326
        %328 = vrot.lane.b32.xlu0 %v313, 2
        %v329 = vpop.permute.xlu0 %328
        %v330 = vmax.f32 %v324, %v327
        %v331 = vmax.f32 %v325, %v329
        %332 = vrot.lane.b32.xlu0 %v312, 126
        %v333 = vpop.permute.xlu0 %332
        %334 = vrot.lane.b32.xlu0 %v313, 126
        %v335 = vpop.permute.xlu0 %334
        %v336 = vmax.f32 %v330, %v333
        %v337 = vmax.f32 %v331, %v335
        %vm338 = vcmp.eq.f32.partialorder %v292, %v336
        %vm339 = vcmp.eq.f32.partialorder %v293, %v337
        %vm340 = vcmp.gt.f32.partialorder %v292, 0.0
        %vm341 = vcmp.gt.f32.partialorder %v293, 0.0
        %vm342 = vmand %vm338, %vm340
        %vm343 = vmand %vm339, %vm341
        %vm344 = vmpackc.low %vm343, %vm342
        %vm345 = vmpackc.even %vm344, %vm344
        %v346 = vsel %vm345, 16843009, 0
        %v347 = vunpack.c.0.s8 %v346
        %v348 = vunpack.c.1.s8 %v346
        %v349 = vpack.c.b16 %v347, %v347
        %v350 = vpack.c.b8 %v349, %v349
        %v351 = vpack.c.b16 %v348, %v348
        %v352 = vpack.c.b8 %v351, %v351
        %s353 = scalar_lea.vmem %s153, 8 [#allocation6]
        %354 = vst.msk [vmem:[%s353] sm:$0x3] %vm223, %v350
        %355 = vst.msk [vmem:[%s353 + $0x2] sm:$0x3] %vm223, %v352
        %s356 = scalar_lea.vmem %s135, 48 [#allocation3]
        %v357 = vld [vmem:[%s356] sm:$0xff]
        %v358 = vld [vmem:[%s356 + $0x8] sm:$0xff]
        %359 = vst.msk [vmem:[#allocation2 + $0x2] sm:$0xff] %vm163, %v357
        %360 = vst.msk [vmem:[#allocation2 + $0xa] sm:$0xff] %vm163, %v358
        %v361 = vld [vmem:[#allocation2] sm:$0xff]
        %v362 = vld [vmem:[#allocation2 + $0x8] sm:$0xff]
        %v363 = vld [vmem:[#allocation2 + $0x1] sm:$0xff]
        %v364 = vld [vmem:[#allocation2 + $0x9] sm:$0xff]
        %v365 = vmax.f32 %v361, %v363
        %v366 = vmax.f32 %v362, %v364
        %v367 = vld [vmem:[#allocation2 + $0x2] sm:$0xff]
        %v368 = vld [vmem:[#allocation2 + $0xa] sm:$0xff]
        %v369 = vmax.f32 %v365, %v367
        %v370 = vmax.f32 %v366, %v368
        %v371 = vld [vmem:[#allocation2 + $0x3] sm:$0xff]
        %v372 = vld [vmem:[#allocation2 + $0xb] sm:$0xff]
        %v373 = vmax.f32 %v369, %v371
        %v374 = vmax.f32 %v370, %v372
        %v375 = vld [vmem:[#allocation2 + $0x4] sm:$0xff]
        %v376 = vld [vmem:[#allocation2 + $0xc] sm:$0xff]
        %v377 = vmax.f32 %v373, %v375
        %v378 = vmax.f32 %v374, %v376
        %379 = vrot.lane.b32.xlu0 %v377, 1
        %v380 = vpop.permute.xlu0 %379
        %381 = vrot.lane.b32.xlu0 %v378, 1
        %v382 = vpop.permute.xlu0 %381
        %v383 = vmax.f32 %v377, %v380
        %v384 = vmax.f32 %v378, %v382
        %385 = vrot.lane.b32.xlu0 %v377, 127
        %v386 = vpop.permute.xlu0 %385
        %387 = vrot.lane.b32.xlu0 %v378, 127
        %v388 = vpop.permute.xlu0 %387
        %v389 = vmax.f32 %v383, %v386
        %v390 = vmax.f32 %v384, %v388
        %391 = vrot.lane.b32.xlu0 %v377, 2
        %v392 = vpop.permute.xlu0 %391
        %393 = vrot.lane.b32.xlu0 %v378, 2
        %v394 = vpop.permute.xlu0 %393
        %v395 = vmax.f32 %v389, %v392
        %v396 = vmax.f32 %v390, %v394
        %397 = vrot.lane.b32.xlu0 %v377, 126
        %v398 = vpop.permute.xlu0 %397
        %399 = vrot.lane.b32.xlu0 %v378, 126
        %v400 = vpop.permute.xlu0 %399
        %v401 = vmax.f32 %v395, %v398
        %v402 = vmax.f32 %v396, %v400
        %vm403 = vcmp.eq.f32.partialorder %v357, %v401
        %vm404 = vcmp.eq.f32.partialorder %v358, %v402
        %vm405 = vcmp.gt.f32.partialorder %v357, 0.0
        %vm406 = vcmp.gt.f32.partialorder %v358, 0.0
        %vm407 = vmand %vm403, %vm405
        %vm408 = vmand %vm404, %vm406
        %vm409 = vmpackc.low %vm408, %vm407
        %vm410 = vmpackc.even %vm409, %vm409
        %v411 = vsel %vm410, 16843009, 0
        %v412 = vunpack.c.0.s8 %v411
        %v413 = vunpack.c.1.s8 %v411
        %v414 = vpack.c.b16 %v412, %v412
        %v415 = vpack.c.b8 %v414, %v414
        %v416 = vpack.c.b16 %v413, %v413
        %v417 = vpack.c.b8 %v416, %v416
        %s418 = scalar_lea.vmem %s153, 12 [#allocation6]
        %419 = vst.msk [vmem:[%s418] sm:$0x3] %vm223, %v415
        %420 = vst.msk [vmem:[%s418 + $0x2] sm:$0x3] %vm223, %v417
        %s421 = sand.u32 %s68, 1
        %s422 = scalar_lea.sflag [#allocation5], %s421
        %s423 = sand.u32 %s68, 1
        %s424 = smul.addr %s423, 16
        %s425 = scalar_lea.vmem [#allocation6], %s424
        // Predicated region
        $region29: #{non_max_suppression_mask.1} parent=23 // pred_check
          %p426 = pneg %p78
        $region30: #{non_max_suppression_mask.1} parent=23 // pred_check_branch
          %428 = sbr.rel (%p426) target = $region32
        $region31: #{non_max_suppression_mask.1} parent=23 // pred_region
          %s429 = smul.u32 4, %s23
          %s431 = ssub.s32 256, 256
          %432 = vsyncadd %s422, %s431
          %s433 = smul.addr %s429, 2
          %s434 = smul.addr %s22, 8
          %s435 = sadd.s32 %s433, %s434
          %s436 = smul.addr %s435, 32
          %s437 = scalar_lea.hbm %s1, %s436
          %s438 = sshll.u32 %s425, 4
          %s439 = int_to_ptr.vmem [resolvable:$true] %s438
          %444 = dma.vmem_to_hbm [thread:$0]  %s439, 256, %s437, %s422, 32, 32, 2
        $region32: #{non_max_suppression_mask.1} parent=23 // pred_fallthru
          _
      $region24: #{non_max_suppression_mask.1} parent=5 // pred_fallthru
        _
      %p445 = scmp.le.s32.totalorder 2, %s13
      // Predicated region
      $region33: #{non_max_suppression_mask.1} parent=5 // pred_check
        %p446 = pneg %p445
      $region34: #{non_max_suppression_mask.1} parent=5 // pred_check_branch
        %448 = sbr.rel (%p446) target = $region36
      $region35: #{non_max_suppression_mask.1} parent=5 // pred_region
        %s449 = ssub.s32 %s13, 2
        // Predicated region
        $region37: #{non_max_suppression_mask.1} parent=35 // pred_check
          %p450 = pneg %p84
        $region38: #{non_max_suppression_mask.1} parent=35 // pred_check_branch
          %452 = sbr.rel (%p450) target = $region40
        $region39: #{non_max_suppression_mask.1} parent=35 // pred_region
          %s453 = sand.u32 %s69, 1
          %s454 = scalar_lea.sflag [#allocation5], %s453
          %s455 = sand.u32 %s69, 1
          %s456 = smul.addr %s455, 16
          %s457 = scalar_lea.vmem [#allocation6], %s456
          %458 = dma.done %s454, 256
        $region40: #{non_max_suppression_mask.1} parent=35 // pred_fallthru
          _
      $region36: #{non_max_suppression_mask.1} parent=5 // pred_fallthru
        _
    $region6: #{non_max_suppression_mask.1} parent=1 // loop_footer
      %s17 = sadd.s32 1, %s13
    $region7: #{non_max_suppression_mask.1} parent=1 // loop_footer_branch
      %12 = sbr.rel target = $region3
    $region8: #{non_max_suppression_mask.1} parent=1 // loop_exit
      _
    %459 = vsyncpa [#allocation4], 1
    %s460 = scalar_lea.sflag [#allocation4], 1
    %461 = vsyncpa %s460, 1
    %462 = vsyncpa [#allocation5], 1
    %s463 = scalar_lea.sflag [#allocation5], 1
    %464 = vsyncpa %s463, 1

</llo_original>
